<compile_context>
chip_gen: v7x
topology: tpu7x:2x2x1
jax: 0.10.0
libtpu: 0.0.40
codegen_flags: <defaults>
</compile_context>

<pallas_src>
from functools import partial

import jax
import jax.numpy as jnp
from jax.experimental import pallas as pl
from jax.experimental.pallas import tpu as pltpu


def _copy_kernel(x_ref, o_ref):
    # Pure lane-dense memcpy of one (TB, n_agents*n_features) tile.
    o_ref[...] = x_ref[...]


def _pick_batch_tile(b, flat_width, itemsize):
    """Largest batch tile (multiple of 8, <=512) that keeps double-buffered
    in+out tiles (4 x TB x flat_width x itemsize) under ~24 MiB VMEM — safe on
    v7x's 64 MiB physical / 32 MiB default-scoped VMEM as well as v5e/v6e."""
    budget_bytes = 24 * 1024 * 1024
    if b <= 8:
        return b  # block dim equals full array dim -> always legal
    tb = min(512, (b // 8) * 8)
    while tb > 8 and 4 * tb * flat_width * itemsize > budget_bytes:
        tb -= 8
    return max(tb, 8)


def reshape_to_multi_agent(x, n_agents, n_features, *, use_pallas=True):
    """Equivalent of torch `x.view(B, n_agents, n_features)` for contiguous x."""
    b = x.shape[0]
    flat = n_agents * n_features
    assert x.shape == (b, flat), (
        f"expected flat input (B, n_agents*n_features)={b, flat}, got {x.shape}")

    if not use_pallas:
        # Fast path: metadata-only view, zero HBM traffic.
        return x.reshape(b, n_agents, n_features)

    # Lane-alignment note: because the kernel copies the *flat* row, there is
    # no per-agent slicing, so n_features does NOT need to be a multiple of
    # 128 for correctness or layout efficiency.  (If a consumer kernel later
    # slices per-agent features, keeping n_features % 128 == 0 avoids masked
    # stores / XLU shuffles there.)
    tb = _pick_batch_tile(b, flat, x.dtype.itemsize)
    grid = (pl.cdiv(b, tb),)

    flat_out = pl.pallas_call(
        _copy_kernel,
        out_shape=jax.ShapeDtypeStruct((b, flat), x.dtype),
        grid_spec=pltpu.PrefetchScalarGridSpec(
            num_scalar_prefetch=0,
            grid=grid,
            in_specs=[pl.BlockSpec((tb, flat), lambda i: (i, 0))],
            out_specs=pl.BlockSpec((tb, flat), lambda i: (i, 0)),
        ),
        compiler_params=pltpu.CompilerParams(
            dimension_semantics=("parallel",),  # lets v7x split copy over 2 TCs
        ),
    )(x)

    # Free (metadata-only) reshape to the 3-D multi-agent layout.
    return flat_out.reshape(b, n_agents, n_features)


if __name__ == "__main__":
    key = jax.random.PRNGKey(0)
    B, N_AGENTS, N_FEATURES = 2, 4, 128  # small, deterministic test shapes

    x = jax.random.normal(key, (B, N_AGENTS * N_FEATURES), dtype=jnp.float32)

    out = reshape_to_multi_agent(x, N_AGENTS, N_FEATURES)
    out = jax.block_until_ready(out)

    expected = x.reshape(B, N_AGENTS, N_FEATURES)  # reference (torch .view)
    assert out.shape == (B, N_AGENTS, N_FEATURES)
    assert out.dtype == x.dtype
    assert jnp.array_equal(out, expected)

    print("KERNEL_OK")
</pallas_src>

<mosaic_0001>
module attributes {stable_mosaic.version = 11 : i64} {
  func.func @_copy_kernel(%arg0: i32, %arg1: memref<2x512xf32, #tpu.memory_space<vmem>>, %arg2: memref<2x512xf32, #tpu.memory_space<vmem>>) attributes {dimension_semantics = [#tpu.dimension_semantics<parallel>], iteration_bounds = array<i64: 1>, scalar_prefetch = 0 : i64, scratch_operands = 0 : i64, tpu.core_type = #tpu.core_type<tc>, window_params = [{transform_indices = @transform_0, window_bounds = array<i64: 2, 512>}, {transform_indices = @transform_1, window_bounds = array<i64: 2, 512>}]} {
    %c0 = arith.constant 0 : index
    %c0_0 = arith.constant 0 : index
    %0 = vector.load %arg1[%c0, %c0_0] : memref<2x512xf32, #tpu.memory_space<vmem>>, vector<2x512xf32>
    %c0_1 = arith.constant 0 : index
    %c0_2 = arith.constant 0 : index
    %1 = vector.load %arg2[%c0_1, %c0_2] : memref<2x512xf32, #tpu.memory_space<vmem>>, vector<2x512xf32>
    tpu.vector_store %arg2[%c0_1, %c0_2], %0 {strides = array<i32>} : memref<2x512xf32, #tpu.memory_space<vmem>>, vector<2x512xf32>,
    return
  }
  func.func @transform_0(%arg0: i32) -> (i32, i32) {
    %c0_i32 = arith.constant 0 : i32
    %c0_i32_0 = arith.constant 0 : i32
    return %arg0, %c0_i32 : i32, i32
  }
  func.func @transform_1(%arg0: i32) -> (i32, i32) {
    %c0_i32 = arith.constant 0 : i32
    %c0_i32_0 = arith.constant 0 : i32
    return %arg0, %c0_i32 : i32, i32
  }
}

</mosaic_0001>

<llo_original>
// kernel: tpu_custom_call.1
$region0: #{tpu_custom_call.1}
  #allocation0 [shape = 'u32[]', space=smem, size = 0x4, offset = 0x4, fixed_abs, tag = 'smem constant byte address 0x4 - core index']
  #allocation1 [shape = 'u32[144,128]{1,0:T(1,128)}', space=vmem, size = 0x12000, scoped, tag = 'internal scratch']
  %s0 = inlined_call_operand.hbm [shape: f32[2,512], index: 0, kind: input, shape index: {}]
  %s1 = inlined_call_operand.hbm [shape: f32[2,512], index: 1, kind: output, shape index: {}]
  %s2 = sld [smem:[#allocation0]]
  $region18: #{tpu_custom_call.1} parent=0
    _
  %s4 = ssub.s32 1, %s2
  %s5 = scalar_select 0, %s4, %s2
  $region1: #{tpu_custom_call.1} parent=0
    #allocation2 [shape = 'u8[4096]{0}', space=vmem, size = 0x1000, scoped, tag = 'input window, operand 0, single buffered']
    #allocation3 [shape = 's32[1]{0}', space=sflag, size = 0x4, scoped, tag = 'scoped memory for tpu_custom_call.1']
    #allocation4 [shape = 's32[1]{0}', space=sflag, size = 0x4, scoped, tag = 'scoped memory for tpu_custom_call.1']
    #allocation5 [shape = 'u8[4096]{0}', space=vmem, size = 0x1000, scoped, tag = 'output window, operand 0, single buffered']
    %6 = vsyncpa [#allocation3], 0
    %7 = vsyncpa [#allocation4], 0
    // Predicated region
    $region2: #{tpu_custom_call.1} parent=1 // pred_check
      _
    $region3: #{tpu_custom_call.1} parent=1 // pred_check_branch
      %9 = sbr.rel (0) target = $region5
    $region4: #{tpu_custom_call.1} parent=1 // pred_region
      %s11 = ssub.s32 128, 128
      %12 = vsyncadd [#allocation3], %s11
      %s14 = sshll.u32 [#allocation2], 4
      %s15 = int_to_ptr.vmem [resolvable:$true] %s14
      %17 = dma.hbm_to_vmem [thread:$0]  %s0, 128, %s15, [#allocation3]
    $region5: #{tpu_custom_call.1} parent=1 // pred_fallthru
      _
    // Predicated region
    $region6: #{tpu_custom_call.1} parent=1 // pred_check
      _
    $region7: #{tpu_custom_call.1} parent=1 // pred_check_branch
      %19 = sbr.rel (0) target = $region9
    $region8: #{tpu_custom_call.1} parent=1 // pred_region
      %20 = dma.done [#allocation3], 128
    $region9: #{tpu_custom_call.1} parent=1 // pred_fallthru
      _
    %v21 = vld [vmem:[#allocation2] sm:$0xff]
    %22 = vst [vmem:[#allocation5] sm:$0xff] %v21
    // Predicated region
    $region10: #{tpu_custom_call.1} parent=1 // pred_check
      _
    $region11: #{tpu_custom_call.1} parent=1 // pred_check_branch
      %24 = sbr.rel (0) target = $region13
    $region12: #{tpu_custom_call.1} parent=1 // pred_region
      %s26 = ssub.s32 128, 128
      %27 = vsyncadd [#allocation4], %s26
      %s29 = sshll.u32 [#allocation5], 4
      %s30 = int_to_ptr.vmem [resolvable:$true] %s29
      %32 = dma.vmem_to_hbm [thread:$0]  %s30, 128, %s1, [#allocation4]
    $region13: #{tpu_custom_call.1} parent=1 // pred_fallthru
      _
    // Predicated region
    $region14: #{tpu_custom_call.1} parent=1 // pred_check
      _
    $region15: #{tpu_custom_call.1} parent=1 // pred_check_branch
      %34 = sbr.rel (0) target = $region17
    $region16: #{tpu_custom_call.1} parent=1 // pred_region
      %35 = dma.done [#allocation4], 128
    $region17: #{tpu_custom_call.1} parent=1 // pred_fallthru
      _
    %36 = vsyncpa [#allocation3], 1
    %37 = vsyncpa [#allocation4], 1

</llo_original>
